<compile_context>
chip_gen: v6e
topology: v6e:2x2x1
jax: 0.10.0
libtpu: 0.0.40
codegen_flags: <defaults>
</compile_context>

<pallas_src>
import jax
import jax.numpy as jnp
import numpy as np
from jax.experimental import pallas as pl
from jax.experimental.pallas import tpu as pltpu


def _rnn_kernel(xw_ref, whh_ref, whead_ref, bhead_ref, out_ref):
    """Single-invocation kernel.

    xw_ref:    (T, B, H)  precomputed x @ W_ih + (b_ih + b_hh)
    whh_ref:   (H, H)     recurrent weights (pre-transposed for right-multiply)
    whead_ref: (H, Opad)  fused [W_br | W_ev | zero-pad] head weights
    bhead_ref: (1, Opad)  fused head bias
    out_ref:   (B, Opad)  fused head output (lane-dense store)
    """
    T, B, H = xw_ref.shape
    w_hh = whh_ref[...]                      # load once, stays resident in vregs/VMEM

    def step(t, h):
        # Serial critical path: one (B,H)x(H,H) MXU dot + VPU add + EUP tanh.
        return jnp.tanh(xw_ref[t] + jnp.dot(h, w_hh,
                                            preferred_element_type=jnp.float32))

    h0 = jnp.zeros((B, H), jnp.float32)
    h_last = jax.lax.fori_loop(0, T, step, h0, unroll=True)

    # Fused epilogue: one dot, one lane-dense store.
    out_ref[...] = (jnp.dot(h_last, whead_ref[...],
                            preferred_element_type=jnp.float32)
                    + bhead_ref[...]).astype(out_ref.dtype)


@jax.jit
def rnn_model_forward(x, w_ih, w_hh, b_combined, w_br, b_br, w_ev, b_ev):
    """x: (B, T, I) batch_first; weights pre-transposed for right-multiplication.

    Returns (br_out (B, O_br), event_out (B, O_ev)) matching the PyTorch module.
    """
    B, T, I = x.shape
    H = w_hh.shape[0]
    O_br = w_br.shape[1]
    O_ev = w_ev.shape[1]
    O_total = O_br + O_ev
    O_pad = max(128, ((O_total + 127) // 128) * 128)   # lane-dense output width

    # --- hoisted input projection (degenerate I=1 matmul; do it once in XLA) ---
    x_tm = jnp.transpose(x, (1, 0, 2))                          # (T, B, I)
    xw = jnp.einsum('tbi,ih->tbh', x_tm, w_ih) + b_combined     # (T, B, H) + (1, H)
    xw = xw.astype(jnp.float32)

    # --- fuse + lane-pad the two heads into one (H, O_pad) matrix ---
    w_head = jnp.zeros((H, O_pad), jnp.float32)
    w_head = w_head.at[:, :O_br].set(w_br).at[:, O_br:O_total].set(w_ev)
    b_head = jnp.zeros((1, O_pad), jnp.float32)
    b_head = b_head.at[:, :O_br].set(b_br).at[:, O_br:O_total].set(b_ev)

    # Single kernel invocation (no grid): every operand is a whole-array VMEM block.
    out = pl.pallas_call(
        _rnn_kernel,
        out_shape=jax.ShapeDtypeStruct((B, O_pad), jnp.float32),
        in_specs=[pl.BlockSpec(memory_space=pltpu.MemorySpace.VMEM)] * 4,
        out_specs=pl.BlockSpec(memory_space=pltpu.MemorySpace.VMEM),
    )(xw, w_hh, w_head, b_head)

    return out[:, :O_br], out[:, O_br:O_total]


def _reference_forward(x, w_ih, w_hh, b_combined, w_br, b_br, w_ev, b_ev):
    """Pure-JAX reference matching torch.nn.RNN (tanh) + two Linear heads."""
    B = x.shape[0]
    H = w_hh.shape[0]
    h = jnp.zeros((B, H), jnp.float32)

    def step(h, x_t):
        h_new = jnp.tanh(x_t @ w_ih + h @ w_hh + b_combined[0])
        return h_new, None

    h_last, _ = jax.lax.scan(step, h, jnp.transpose(x, (1, 0, 2)))
    return h_last @ w_br + b_br[0], h_last @ w_ev + b_ev[0]


if __name__ == "__main__":
    # Module hyperparameters (small, consistent with the PyTorch module).
    B, T = 2, 8                 # batch, sequence length
    input_size = 1
    hidden_size = 128
    br_output_size = 3
    event_output_size = 4

    key = jax.random.PRNGKey(0)
    keys = jax.random.split(key, 9)
    bound = 1.0 / np.sqrt(hidden_size)   # PyTorch default init range for RNN/Linear

    # Parameters, stored pre-transposed for right-multiplication:
    # torch W_ih is (H, I) -> here (I, H); W_hh is (H, H) -> here transposed.
    w_ih = jax.random.uniform(keys[0], (input_size, hidden_size), jnp.float32, -bound, bound)
    w_hh = jax.random.uniform(keys[1], (hidden_size, hidden_size), jnp.float32, -bound, bound)
    b_ih = jax.random.uniform(keys[2], (hidden_size,), jnp.float32, -bound, bound)
    b_hh = jax.random.uniform(keys[3], (hidden_size,), jnp.float32, -bound, bound)
    b_combined = (b_ih + b_hh).reshape(1, hidden_size)

    w_br = jax.random.uniform(keys[4], (hidden_size, br_output_size), jnp.float32, -bound, bound)
    b_br = jax.random.uniform(keys[5], (1, br_output_size), jnp.float32, -bound, bound)
    w_ev = jax.random.uniform(keys[6], (hidden_size, event_output_size), jnp.float32, -bound, bound)
    b_ev = jax.random.uniform(keys[7], (1, event_output_size), jnp.float32, -bound, bound)

    x = jax.random.normal(keys[8], (B, T, input_size), jnp.float32)

    br_out, ev_out = rnn_model_forward(x, w_ih, w_hh, b_combined,
                                       w_br, b_br, w_ev, b_ev)
    jax.block_until_ready((br_out, ev_out))

    br_ref, ev_ref = _reference_forward(x, w_ih, w_hh, b_combined,
                                        w_br, b_br, w_ev, b_ev)
    np.testing.assert_allclose(np.asarray(br_out), np.asarray(br_ref), rtol=1e-5, atol=1e-5)
    np.testing.assert_allclose(np.asarray(ev_out), np.asarray(ev_ref), rtol=1e-5, atol=1e-5)

    print("KERNEL_OK")
</pallas_src>

<mosaic_0001>
module attributes {stable_mosaic.version = 11 : i64} {
  func.func @_rnn_kernel(%arg0: memref<8x2x128xf32, #tpu.memory_space<vmem>>, %arg1: memref<128x128xf32, #tpu.memory_space<vmem>>, %arg2: memref<128x128xf32, #tpu.memory_space<vmem>>, %arg3: memref<1x128xf32, #tpu.memory_space<vmem>>, %arg4: memref<2x128xf32, #tpu.memory_space<vmem>>) attributes {dimension_semantics = [], scalar_prefetch = 0 : i64, scratch_operands = 0 : i64, tpu.core_type = #tpu.core_type<tc>} {
    %c0 = arith.constant 0 : index
    %c0_0 = arith.constant 0 : index
    %0 = vector.load %arg1[%c0, %c0_0] : memref<128x128xf32, #tpu.memory_space<vmem>>, vector<128x128xf32>
    %cst = arith.constant 0.000000e+00 : f32
    %1 = vector.broadcast %cst : f32 to vector<2x128xf32>
    %c0_i32 = arith.constant 0 : i32
    %2 = arith.index_cast %c0_i32 : i32 to index
    %c0_1 = arith.constant 0 : index
    %c0_2 = arith.constant 0 : index
    %3 = vector.load %arg0[%2, %c0_1, %c0_2] : memref<8x2x128xf32, #tpu.memory_space<vmem>>, vector<1x2x128xf32>
    %4 = vector.shape_cast %3 : vector<1x2x128xf32> to vector<2x128xf32>
    %cst_3 = arith.constant dense<0.000000e+00> : vector<2x128xf32>
    %5 = tpu.matmul %1, %0, %cst_3 {dimension_numbers = #tpu.dot_dimension_numbers<[1], [0], [0], [1], [0, 0, 1, 1], [], []>} : vector<2x128xf32>, vector<128x128xf32>, vector<2x128xf32> -> vector<2x128xf32>
    %6 = arith.addf %4, %5 : vector<2x128xf32>
    %7 = math.tanh %6 : vector<2x128xf32>
    %c1_i32 = arith.constant 1 : i32
    %8 = arith.index_cast %c1_i32 : i32 to index
    %c0_4 = arith.constant 0 : index
    %c0_5 = arith.constant 0 : index
    %9 = vector.load %arg0[%8, %c0_4, %c0_5] : memref<8x2x128xf32, #tpu.memory_space<vmem>>, vector<1x2x128xf32>
    %10 = vector.shape_cast %9 : vector<1x2x128xf32> to vector<2x128xf32>
    %cst_6 = arith.constant dense<0.000000e+00> : vector<2x128xf32>
    %11 = tpu.matmul %7, %0, %cst_6 {dimension_numbers = #tpu.dot_dimension_numbers<[1], [0], [0], [1], [0, 0, 1, 1], [], []>} : vector<2x128xf32>, vector<128x128xf32>, vector<2x128xf32> -> vector<2x128xf32>
    %12 = arith.addf %10, %11 : vector<2x128xf32>
    %13 = math.tanh %12 : vector<2x128xf32>
    %c2_i32 = arith.constant 2 : i32
    %14 = arith.index_cast %c2_i32 : i32 to index
    %c0_7 = arith.constant 0 : index
    %c0_8 = arith.constant 0 : index
    %15 = vector.load %arg0[%14, %c0_7, %c0_8] : memref<8x2x128xf32, #tpu.memory_space<vmem>>, vector<1x2x128xf32>
    %16 = vector.shape_cast %15 : vector<1x2x128xf32> to vector<2x128xf32>
    %cst_9 = arith.constant dense<0.000000e+00> : vector<2x128xf32>
    %17 = tpu.matmul %13, %0, %cst_9 {dimension_numbers = #tpu.dot_dimension_numbers<[1], [0], [0], [1], [0, 0, 1, 1], [], []>} : vector<2x128xf32>, vector<128x128xf32>, vector<2x128xf32> -> vector<2x128xf32>
    %18 = arith.addf %16, %17 : vector<2x128xf32>
    %19 = math.tanh %18 : vector<2x128xf32>
    %c3_i32 = arith.constant 3 : i32
    %20 = arith.index_cast %c3_i32 : i32 to index
    %c0_10 = arith.constant 0 : index
    %c0_11 = arith.constant 0 : index
    %21 = vector.load %arg0[%20, %c0_10, %c0_11] : memref<8x2x128xf32, #tpu.memory_space<vmem>>, vector<1x2x128xf32>
    %22 = vector.shape_cast %21 : vector<1x2x128xf32> to vector<2x128xf32>
    %cst_12 = arith.constant dense<0.000000e+00> : vector<2x128xf32>
    %23 = tpu.matmul %19, %0, %cst_12 {dimension_numbers = #tpu.dot_dimension_numbers<[1], [0], [0], [1], [0, 0, 1, 1], [], []>} : vector<2x128xf32>, vector<128x128xf32>, vector<2x128xf32> -> vector<2x128xf32>
    %24 = arith.addf %22, %23 : vector<2x128xf32>
    %25 = math.tanh %24 : vector<2x128xf32>
    %c4_i32 = arith.constant 4 : i32
    %26 = arith.index_cast %c4_i32 : i32 to index
    %c0_13 = arith.constant 0 : index
    %c0_14 = arith.constant 0 : index
    %27 = vector.load %arg0[%26, %c0_13, %c0_14] : memref<8x2x128xf32, #tpu.memory_space<vmem>>, vector<1x2x128xf32>
    %28 = vector.shape_cast %27 : vector<1x2x128xf32> to vector<2x128xf32>
    %cst_15 = arith.constant dense<0.000000e+00> : vector<2x128xf32>
    %29 = tpu.matmul %25, %0, %cst_15 {dimension_numbers = #tpu.dot_dimension_numbers<[1], [0], [0], [1], [0, 0, 1, 1], [], []>} : vector<2x128xf32>, vector<128x128xf32>, vector<2x128xf32> -> vector<2x128xf32>
    %30 = arith.addf %28, %29 : vector<2x128xf32>
    %31 = math.tanh %30 : vector<2x128xf32>
    %c5_i32 = arith.constant 5 : i32
    %32 = arith.index_cast %c5_i32 : i32 to index
    %c0_16 = arith.constant 0 : index
    %c0_17 = arith.constant 0 : index
    %33 = vector.load %arg0[%32, %c0_16, %c0_17] : memref<8x2x128xf32, #tpu.memory_space<vmem>>, vector<1x2x128xf32>
    %34 = vector.shape_cast %33 : vector<1x2x128xf32> to vector<2x128xf32>
    %cst_18 = arith.constant dense<0.000000e+00> : vector<2x128xf32>
    %35 = tpu.matmul %31, %0, %cst_18 {dimension_numbers = #tpu.dot_dimension_numbers<[1], [0], [0], [1], [0, 0, 1, 1], [], []>} : vector<2x128xf32>, vector<128x128xf32>, vector<2x128xf32> -> vector<2x128xf32>
    %36 = arith.addf %34, %35 : vector<2x128xf32>
    %37 = math.tanh %36 : vector<2x128xf32>
    %c6_i32 = arith.constant 6 : i32
    %38 = arith.index_cast %c6_i32 : i32 to index
    %c0_19 = arith.constant 0 : index
    %c0_20 = arith.constant 0 : index
    %39 = vector.load %arg0[%38, %c0_19, %c0_20] : memref<8x2x128xf32, #tpu.memory_space<vmem>>, vector<1x2x128xf32>
    %40 = vector.shape_cast %39 : vector<1x2x128xf32> to vector<2x128xf32>
    %cst_21 = arith.constant dense<0.000000e+00> : vector<2x128xf32>
    %41 = tpu.matmul %37, %0, %cst_21 {dimension_numbers = #tpu.dot_dimension_numbers<[1], [0], [0], [1], [0, 0, 1, 1], [], []>} : vector<2x128xf32>, vector<128x128xf32>, vector<2x128xf32> -> vector<2x128xf32>
    %42 = arith.addf %40, %41 : vector<2x128xf32>
    %43 = math.tanh %42 : vector<2x128xf32>
    %c7_i32 = arith.constant 7 : i32
    %44 = arith.index_cast %c7_i32 : i32 to index
    %c0_22 = arith.constant 0 : index
    %c0_23 = arith.constant 0 : index
    %45 = vector.load %arg0[%44, %c0_22, %c0_23] : memref<8x2x128xf32, #tpu.memory_space<vmem>>, vector<1x2x128xf32>
    %46 = vector.shape_cast %45 : vector<1x2x128xf32> to vector<2x128xf32>
    %cst_24 = arith.constant dense<0.000000e+00> : vector<2x128xf32>
    %47 = tpu.matmul %43, %0, %cst_24 {dimension_numbers = #tpu.dot_dimension_numbers<[1], [0], [0], [1], [0, 0, 1, 1], [], []>} : vector<2x128xf32>, vector<128x128xf32>, vector<2x128xf32> -> vector<2x128xf32>
    %48 = arith.addf %46, %47 : vector<2x128xf32>
    %49 = math.tanh %48 : vector<2x128xf32>
    %c8_i32 = arith.constant 8 : i32
    %c0_25 = arith.constant 0 : index
    %c0_26 = arith.constant 0 : index
    %50 = vector.load %arg2[%c0_25, %c0_26] : memref<128x128xf32, #tpu.memory_space<vmem>>, vector<128x128xf32>
    %cst_27 = arith.constant dense<0.000000e+00> : vector<2x128xf32>
    %51 = tpu.matmul %49, %50, %cst_27 {dimension_numbers = #tpu.dot_dimension_numbers<[1], [0], [0], [1], [0, 0, 1, 1], [], []>} : vector<2x128xf32>, vector<128x128xf32>, vector<2x128xf32> -> vector<2x128xf32>
    %c0_28 = arith.constant 0 : index
    %c0_29 = arith.constant 0 : index
    %52 = vector.load %arg3[%c0_28, %c0_29] : memref<1x128xf32, #tpu.memory_space<vmem>>, vector<1x128xf32>
    %53 = vector.broadcast %52 : vector<1x128xf32> to vector<2x128xf32>
    %54 = arith.addf %51, %53 : vector<2x128xf32>
    %c0_30 = arith.constant 0 : index
    %c0_31 = arith.constant 0 : index
    %55 = vector.load %arg4[%c0_30, %c0_31] : memref<2x128xf32, #tpu.memory_space<vmem>>, vector<2x128xf32>
    tpu.vector_store %arg4[%c0_30, %c0_31], %54 {strides = array<i32>} : memref<2x128xf32, #tpu.memory_space<vmem>>, vector<2x128xf32>,
    return
  }
}

</mosaic_0001>

<llo_original>
// kernel: rnn_model_forward.1
$region0: #{rnn_model_forward.1}
  #allocation0 [shape = 'u32[]', space=smem, size = 0x4, offset = 0x4, fixed_abs, tag = 'smem constant byte address 0x4 - core index']
  #allocation1 [shape = 'u32[144,128]{1,0:T(1,128)}', space=vmem, size = 0x12000, scoped, tag = 'internal scratch']
  %s0 = inlined_call_operand.vmem [shape: f32[8,2,128], index: 0, kind: input, shape index: {}]
  %s1 = inlined_call_operand.vmem [shape: f32[128,128], index: 1, kind: input, shape index: {}]
  %s2 = inlined_call_operand.vmem [shape: f32[128,128], index: 2, kind: input, shape index: {}]
  %s3 = inlined_call_operand.vmem [shape: f32[1,128], index: 3, kind: input, shape index: {}]
  %s4 = inlined_call_operand.vmem [shape: f32[2,128], index: 4, kind: output, shape index: {}]
  %s5 = sld [smem:[#allocation0]]
  $region26: #{rnn_model_forward.1} parent=0
    _
  %s7 = ssub.s32 1, %s5
  %s8 = scalar_select 0, %s7, %s5
  // Predicated region
  $region2: #{rnn_model_forward.1} parent=0 // pred_check
    _
  $region3: #{rnn_model_forward.1} parent=0 // pred_check_branch
    %10 = sbr.rel (0) target = $region5
  $region4: #{rnn_model_forward.1} parent=0 // pred_region
    _
  $region5: #{rnn_model_forward.1} parent=0 // pred_fallthru
    _
  // Predicated region
  $region6: #{rnn_model_forward.1} parent=0 // pred_check
    _
  $region7: #{rnn_model_forward.1} parent=0 // pred_check_branch
    %12 = sbr.rel (0) target = $region9
  $region8: #{rnn_model_forward.1} parent=0 // pred_region
    _
  $region9: #{rnn_model_forward.1} parent=0 // pred_fallthru
    _
  // Predicated region
  $region10: #{rnn_model_forward.1} parent=0 // pred_check
    _
  $region11: #{rnn_model_forward.1} parent=0 // pred_check_branch
    %14 = sbr.rel (0) target = $region13
  $region12: #{rnn_model_forward.1} parent=0 // pred_region
    _
  $region13: #{rnn_model_forward.1} parent=0 // pred_fallthru
    _
  // Predicated region
  $region14: #{rnn_model_forward.1} parent=0 // pred_check
    _
  $region15: #{rnn_model_forward.1} parent=0 // pred_check_branch
    %16 = sbr.rel (0) target = $region17
  $region16: #{rnn_model_forward.1} parent=0 // pred_region
    _
  $region17: #{rnn_model_forward.1} parent=0 // pred_fallthru
    _
  %v17 = vld [vmem:[%s1] sm:$0xff]
  %v18 = vld [vmem:[%s1 + $0x8] sm:$0xff]
  %v19 = vld [vmem:[%s1 + $0x10] sm:$0xff]
  %v20 = vld [vmem:[%s1 + $0x18] sm:$0xff]
  %v21 = vld [vmem:[%s1 + $0x20] sm:$0xff]
  %v22 = vld [vmem:[%s1 + $0x28] sm:$0xff]
  %v23 = vld [vmem:[%s1 + $0x30] sm:$0xff]
  %v24 = vld [vmem:[%s1 + $0x38] sm:$0xff]
  %v25 = vld [vmem:[%s1 + $0x40] sm:$0xff]
  %v26 = vld [vmem:[%s1 + $0x48] sm:$0xff]
  %v27 = vld [vmem:[%s1 + $0x50] sm:$0xff]
  %v28 = vld [vmem:[%s1 + $0x58] sm:$0xff]
  %v29 = vld [vmem:[%s1 + $0x60] sm:$0xff]
  %v30 = vld [vmem:[%s1 + $0x68] sm:$0xff]
  %v31 = vld [vmem:[%s1 + $0x70] sm:$0xff]
  %v32 = vld [vmem:[%s1 + $0x78] sm:$0xff]
  %v33 = vld [vmem:[%s0] sm:$0x3]
  %34 = vmatprep.subr.mxu0 0.0
  %35 = vmatpush1.msra.mxu0 %v32
  %36 = vmatprep.subr.mxu0 0.0
  %37 = vmatpush1.msra.mxu0 %v31
  %38 = vmatprep.subr.mxu0 0.0
  %39 = vmatpush1.msra.mxu0 %v30
  %40 = vmatprep.subr.mxu0 0.0
  %41 = vmatpush1.msra.mxu0 %v29
  %42 = vmatprep.subr.mxu0 0.0
  %43 = vmatpush1.msra.mxu0 %v28
  %44 = vmatprep.subr.mxu0 0.0
  %45 = vmatpush1.msra.mxu0 %v27
  %46 = vmatprep.subr.mxu0 0.0
  %47 = vmatpush1.msra.mxu0 %v26
  %48 = vmatprep.subr.mxu0 0.0
  %49 = vmatpush1.msra.mxu0 %v25
  %50 = vmatprep.subr.mxu0 0.0
  %51 = vmatpush1.msra.mxu0 %v24
  %52 = vmatprep.subr.mxu0 0.0
  %53 = vmatpush1.msra.mxu0 %v23
  %54 = vmatprep.subr.mxu0 0.0
  %55 = vmatpush1.msra.mxu0 %v22
  %56 = vmatprep.subr.mxu0 0.0
  %57 = vmatpush1.msra.mxu0 %v21
  %58 = vmatprep.subr.mxu0 0.0
  %59 = vmatpush1.msra.mxu0 %v20
  %60 = vmatprep.subr.mxu0 0.0
  %61 = vmatpush1.msra.mxu0 %v19
  %62 = vmatprep.subr.mxu0 0.0
  %63 = vmatpush1.msra.mxu0 %v18
  %64 = vmatprep.subr.mxu0 0.0
  %65 = vmatpush1.msra.mxu0 %v17
  %66 = vmatprep.subr.mxu0 0.0
  %67 = vmatpush2.msra.mxu0 0.0
  %68 = vmatprep.subr.mxu0 0.0
  %69 = vmatpush2.msra.mxu0 0.0
  %70 = vmatprep.subr.mxu0 0.0
  %71 = vmatpush2.msra.mxu0 0.0
  %72 = vmatprep.subr.mxu0 0.0
  %73 = vmatpush2.msra.mxu0 0.0
  %74 = vmatprep.subr.mxu0 0.0
  %75 = vmatpush2.msra.mxu0 0.0
  %76 = vmatprep.subr.mxu0 0.0
  %77 = vmatpush2.msra.mxu0 0.0
  %78 = vmatprep.subr.mxu0 0.0
  %79 = vmatpush2.msra.mxu0 0.0
  %80 = vmatprep.subr.mxu0 0.0
  %81 = vmatpush2.msra.mxu0 0.0
  %82 = vmatprep.subr.mxu0 0.0
  %83 = vmatpush2.msra.mxu0 0.0
  %84 = vmatprep.subr.mxu0 0.0
  %85 = vmatpush2.msra.mxu0 0.0
  %86 = vmatprep.subr.mxu0 0.0
  %87 = vmatpush2.msra.mxu0 0.0
  %88 = vmatprep.subr.mxu0 0.0
  %89 = vmatpush2.msra.mxu0 0.0
  %90 = vmatprep.subr.mxu0 0.0
  %91 = vmatpush2.msra.mxu0 0.0
  %92 = vmatprep.subr.mxu0 0.0
  %93 = vmatpush2.msra.mxu0 0.0
  %94 = vmatprep.subr.mxu0 0.0
  %95 = vmatpush2.msra.mxu0 0.0
  %96 = vmatprep.subr.mxu0 0.0
  %97 = vmatpush2.msra.mxu0 0.0
  %98 = vmatprep.mubr.f32.mxu0 0.0
  %99 = vmatmul.mubr.f32.gmra.mxu0 0.0
  %v100 = vpop.f32.mrf.mxu0
  %v101 = vadd.f32 0.0, %v100
  %v102 = vpop.f32.mrf.mxu0
  %103 = vdwg.mxu0
  %v104 = vadd.f32 %v33, %v101
  %v105 = vtanh.pop %v104
  %s106 = scalar_lea.vmem %s0, 2
  %v107 = vld [vmem:[%s106] sm:$0x3]
  %108 = vmatprep.subr.mxu0 0.0
  %109 = vmatpush1.msra.mxu0 %v32
  %110 = vmatprep.subr.mxu0 0.0
  %111 = vmatpush1.msra.mxu0 %v31
  %112 = vmatprep.subr.mxu0 0.0
  %113 = vmatpush1.msra.mxu0 %v30
  %114 = vmatprep.subr.mxu0 0.0
  %115 = vmatpush1.msra.mxu0 %v29
  %116 = vmatprep.subr.mxu0 0.0
  %117 = vmatpush1.msra.mxu0 %v28
  %118 = vmatprep.subr.mxu0 0.0
  %119 = vmatpush1.msra.mxu0 %v27
  %120 = vmatprep.subr.mxu0 0.0
  %121 = vmatpush1.msra.mxu0 %v26
  %122 = vmatprep.subr.mxu0 0.0
  %123 = vmatpush1.msra.mxu0 %v25
  %124 = vmatprep.subr.mxu0 0.0
  %125 = vmatpush1.msra.mxu0 %v24
  %126 = vmatprep.subr.mxu0 0.0
  %127 = vmatpush1.msra.mxu0 %v23
  %128 = vmatprep.subr.mxu0 0.0
  %129 = vmatpush1.msra.mxu0 %v22
  %130 = vmatprep.subr.mxu0 0.0
  %131 = vmatpush1.msra.mxu0 %v21
  %132 = vmatprep.subr.mxu0 0.0
  %133 = vmatpush1.msra.mxu0 %v20
  %134 = vmatprep.subr.mxu0 0.0
  %135 = vmatpush1.msra.mxu0 %v19
  %136 = vmatprep.subr.mxu0 0.0
  %137 = vmatpush1.msra.mxu0 %v18
  %138 = vmatprep.subr.mxu0 0.0
  %139 = vmatpush1.msra.mxu0 %v17
  %140 = vmatprep.subr.mxu0 0.0
  %141 = vmatpush2.msra.mxu0 0.0
  %142 = vmatprep.subr.mxu0 0.0
  %143 = vmatpush2.msra.mxu0 0.0
  %144 = vmatprep.subr.mxu0 0.0
  %145 = vmatpush2.msra.mxu0 0.0
  %146 = vmatprep.subr.mxu0 0.0
  %147 = vmatpush2.msra.mxu0 0.0
  %148 = vmatprep.subr.mxu0 0.0
  %149 = vmatpush2.msra.mxu0 0.0
  %150 = vmatprep.subr.mxu0 0.0
  %151 = vmatpush2.msra.mxu0 0.0
  %152 = vmatprep.subr.mxu0 0.0
  %153 = vmatpush2.msra.mxu0 0.0
  %154 = vmatprep.subr.mxu0 0.0
  %155 = vmatpush2.msra.mxu0 0.0
  %156 = vmatprep.subr.mxu0 0.0
  %157 = vmatpush2.msra.mxu0 0.0
  %158 = vmatprep.subr.mxu0 0.0
  %159 = vmatpush2.msra.mxu0 0.0
  %160 = vmatprep.subr.mxu0 0.0
  %161 = vmatpush2.msra.mxu0 0.0
  %162 = vmatprep.subr.mxu0 0.0
  %163 = vmatpush2.msra.mxu0 0.0
  %164 = vmatprep.subr.mxu0 0.0
  %165 = vmatpush2.msra.mxu0 0.0
  %166 = vmatprep.subr.mxu0 0.0
  %167 = vmatpush2.msra.mxu0 0.0
  %168 = vmatprep.subr.mxu0 0.0
  %169 = vmatpush2.msra.mxu0 0.0
  %170 = vmatprep.subr.mxu0 0.0
  %171 = vmatpush2.msra.mxu0 0.0
  %172 = vmatprep.mubr.f32.mxu0 0.0
  %173 = vmatmul.mubr.f32.gmra.mxu0 %v105
  %v174 = vpop.f32.mrf.mxu0
  %v175 = vadd.f32 0.0, %v174
  %v176 = vpop.f32.mrf.mxu0
  %177 = vdwg.mxu0
  %v178 = vadd.f32 %v107, %v175
  %v179 = vtanh.pop %v178
  %s180 = scalar_lea.vmem %s0, 4
  %v181 = vld [vmem:[%s180] sm:$0x3]
  %182 = vmatprep.subr.mxu0 0.0
  %183 = vmatpush1.msra.mxu0 %v32
  %184 = vmatprep.subr.mxu0 0.0
  %185 = vmatpush1.msra.mxu0 %v31
  %186 = vmatprep.subr.mxu0 0.0
  %187 = vmatpush1.msra.mxu0 %v30
  %188 = vmatprep.subr.mxu0 0.0
  %189 = vmatpush1.msra.mxu0 %v29
  %190 = vmatprep.subr.mxu0 0.0
  %191 = vmatpush1.msra.mxu0 %v28
  %192 = vmatprep.subr.mxu0 0.0
  %193 = vmatpush1.msra.mxu0 %v27
  %194 = vmatprep.subr.mxu0 0.0
  %195 = vmatpush1.msra.mxu0 %v26
  %196 = vmatprep.subr.mxu0 0.0
  %197 = vmatpush1.msra.mxu0 %v25
  %198 = vmatprep.subr.mxu0 0.0
  %199 = vmatpush1.msra.mxu0 %v24
  %200 = vmatprep.subr.mxu0 0.0
  %201 = vmatpush1.msra.mxu0 %v23
  %202 = vmatprep.subr.mxu0 0.0
  %203 = vmatpush1.msra.mxu0 %v22
  %204 = vmatprep.subr.mxu0 0.0
  %205 = vmatpush1.msra.mxu0 %v21
  %206 = vmatprep.subr.mxu0 0.0
  %207 = vmatpush1.msra.mxu0 %v20
  %208 = vmatprep.subr.mxu0 0.0
  %209 = vmatpush1.msra.mxu0 %v19
  %210 = vmatprep.subr.mxu0 0.0
  %211 = vmatpush1.msra.mxu0 %v18
  %212 = vmatprep.subr.mxu0 0.0
  %213 = vmatpush1.msra.mxu0 %v17
  %214 = vmatprep.subr.mxu0 0.0
  %215 = vmatpush2.msra.mxu0 0.0
  %216 = vmatprep.subr.mxu0 0.0
  %217 = vmatpush2.msra.mxu0 0.0
  %218 = vmatprep.subr.mxu0 0.0
  %219 = vmatpush2.msra.mxu0 0.0
  %220 = vmatprep.subr.mxu0 0.0
  %221 = vmatpush2.msra.mxu0 0.0
  %222 = vmatprep.subr.mxu0 0.0
  %223 = vmatpush2.msra.mxu0 0.0
  %224 = vmatprep.subr.mxu0 0.0
  %225 = vmatpush2.msra.mxu0 0.0
  %226 = vmatprep.subr.mxu0 0.0
  %227 = vmatpush2.msra.mxu0 0.0
  %228 = vmatprep.subr.mxu0 0.0
  %229 = vmatpush2.msra.mxu0 0.0
  %230 = vmatprep.subr.mxu0 0.0
  %231 = vmatpush2.msra.mxu0 0.0
  %232 = vmatprep.subr.mxu0 0.0
  %233 = vmatpush2.msra.mxu0 0.0
  %234 = vmatprep.subr.mxu0 0.0
  %235 = vmatpush2.msra.mxu0 0.0
  %236 = vmatprep.subr.mxu0 0.0
  %237 = vmatpush2.msra.mxu0 0.0
  %238 = vmatprep.subr.mxu0 0.0
  %239 = vmatpush2.msra.mxu0 0.0
  %240 = vmatprep.subr.mxu0 0.0
  %241 = vmatpush2.msra.mxu0 0.0
  %242 = vmatprep.subr.mxu0 0.0
  %243 = vmatpush2.msra.mxu0 0.0
  %244 = vmatprep.subr.mxu0 0.0
  %245 = vmatpush2.msra.mxu0 0.0
  %246 = vmatprep.mubr.f32.mxu0 0.0
  %247 = vmatmul.mubr.f32.gmra.mxu0 %v179
  %v248 = vpop.f32.mrf.mxu0
  %v249 = vadd.f32 0.0, %v248
  %v250 = vpop.f32.mrf.mxu0
  %251 = vdwg.mxu0
  %v252 = vadd.f32 %v181, %v249
  %v253 = vtanh.pop %v252
  %s254 = scalar_lea.vmem %s0, 6
  %v255 = vld [vmem:[%s254] sm:$0x3]
  %256 = vmatprep.subr.mxu0 0.0
  %257 = vmatpush1.msra.mxu0 %v32
  %258 = vmatprep.subr.mxu0 0.0
  %259 = vmatpush1.msra.mxu0 %v31
  %260 = vmatprep.subr.mxu0 0.0
  %261 = vmatpush1.msra.mxu0 %v30
  %262 = vmatprep.subr.mxu0 0.0
  %263 = vmatpush1.msra.mxu0 %v29
  %264 = vmatprep.subr.mxu0 0.0
  %265 = vmatpush1.msra.mxu0 %v28
  %266 = vmatprep.subr.mxu0 0.0
  %267 = vmatpush1.msra.mxu0 %v27
  %268 = vmatprep.subr.mxu0 0.0
  %269 = vmatpush1.msra.mxu0 %v26
  %270 = vmatprep.subr.mxu0 0.0
  %271 = vmatpush1.msra.mxu0 %v25
  %272 = vmatprep.subr.mxu0 0.0
  %273 = vmatpush1.msra.mxu0 %v24
  %274 = vmatprep.subr.mxu0 0.0
  %275 = vmatpush1.msra.mxu0 %v23
  %276 = vmatprep.subr.mxu0 0.0
  %277 = vmatpush1.msra.mxu0 %v22
  %278 = vmatprep.subr.mxu0 0.0
  %279 = vmatpush1.msra.mxu0 %v21
  %280 = vmatprep.subr.mxu0 0.0
  %281 = vmatpush1.msra.mxu0 %v20
  %282 = vmatprep.subr.mxu0 0.0
  %283 = vmatpush1.msra.mxu0 %v19
  %284 = vmatprep.subr.mxu0 0.0
  %285 = vmatpush1.msra.mxu0 %v18
  %286 = vmatprep.subr.mxu0 0.0
  %287 = vmatpush1.msra.mxu0 %v17
  %288 = vmatprep.subr.mxu0 0.0
  %289 = vmatpush2.msra.mxu0 0.0
  %290 = vmatprep.subr.mxu0 0.0
  %291 = vmatpush2.msra.mxu0 0.0
  %292 = vmatprep.subr.mxu0 0.0
  %293 = vmatpush2.msra.mxu0 0.0
  %294 = vmatprep.subr.mxu0 0.0
  %295 = vmatpush2.msra.mxu0 0.0
  %296 = vmatprep.subr.mxu0 0.0
  %297 = vmatpush2.msra.mxu0 0.0
  %298 = vmatprep.subr.mxu0 0.0
  %299 = vmatpush2.msra.mxu0 0.0
  %300 = vmatprep.subr.mxu0 0.0
  %301 = vmatpush2.msra.mxu0 0.0
  %302 = vmatprep.subr.mxu0 0.0
  %303 = vmatpush2.msra.mxu0 0.0
  %304 = vmatprep.subr.mxu0 0.0
  %305 = vmatpush2.msra.mxu0 0.0
  %306 = vmatprep.subr.mxu0 0.0
  %307 = vmatpush2.msra.mxu0 0.0
  %308 = vmatprep.subr.mxu0 0.0
  %309 = vmatpush2.msra.mxu0 0.0
  %310 = vmatprep.subr.mxu0 0.0
  %311 = vmatpush2.msra.mxu0 0.0
  %312 = vmatprep.subr.mxu0 0.0
  %313 = vmatpush2.msra.mxu0 0.0
  %314 = vmatprep.subr.mxu0 0.0
  %315 = vmatpush2.msra.mxu0 0.0
  %316 = vmatprep.subr.mxu0 0.0
  %317 = vmatpush2.msra.mxu0 0.0
  %318 = vmatprep.subr.mxu0 0.0
  %319 = vmatpush2.msra.mxu0 0.0
  %320 = vmatprep.mubr.f32.mxu0 0.0
  %321 = vmatmul.mubr.f32.gmra.mxu0 %v253
  %v322 = vpop.f32.mrf.mxu0
  %v323 = vadd.f32 0.0, %v322
  %v324 = vpop.f32.mrf.mxu0
  %325 = vdwg.mxu0
  %v326 = vadd.f32 %v255, %v323
  %v327 = vtanh.pop %v326
  %s328 = scalar_lea.vmem %s0, 8
  %v329 = vld [vmem:[%s328] sm:$0x3]
  %330 = vmatprep.subr.mxu0 0.0
  %331 = vmatpush1.msra.mxu0 %v32
  %332 = vmatprep.subr.mxu0 0.0
  %333 = vmatpush1.msra.mxu0 %v31
  %334 = vmatprep.subr.mxu0 0.0
  %335 = vmatpush1.msra.mxu0 %v30
  %336 = vmatprep.subr.mxu0 0.0
  %337 = vmatpush1.msra.mxu0 %v29
  %338 = vmatprep.subr.mxu0 0.0
  %339 = vmatpush1.msra.mxu0 %v28
  %340 = vmatprep.subr.mxu0 0.0
  %341 = vmatpush1.msra.mxu0 %v27
  %342 = vmatprep.subr.mxu0 0.0
  %343 = vmatpush1.msra.mxu0 %v26
  %344 = vmatprep.subr.mxu0 0.0
  %345 = vmatpush1.msra.mxu0 %v25
  %346 = vmatprep.subr.mxu0 0.0
  %347 = vmatpush1.msra.mxu0 %v24
  %348 = vmatprep.subr.mxu0 0.0
  %349 = vmatpush1.msra.mxu0 %v23
  %350 = vmatprep.subr.mxu0 0.0
  %351 = vmatpush1.msra.mxu0 %v22
  %352 = vmatprep.subr.mxu0 0.0
  %353 = vmatpush1.msra.mxu0 %v21
  %354 = vmatprep.subr.mxu0 0.0
  %355 = vmatpush1.msra.mxu0 %v20
  %356 = vmatprep.subr.mxu0 0.0
  %357 = vmatpush1.msra.mxu0 %v19
  %358 = vmatprep.subr.mxu0 0.0
  %359 = vmatpush1.msra.mxu0 %v18
  %360 = vmatprep.subr.mxu0 0.0
  %361 = vmatpush1.msra.mxu0 %v17
  %362 = vmatprep.subr.mxu0 0.0
  %363 = vmatpush2.msra.mxu0 0.0
  %364 = vmatprep.subr.mxu0 0.0
  %365 = vmatpush2.msra.mxu0 0.0
  %366 = vmatprep.subr.mxu0 0.0
  %367 = vmatpush2.msra.mxu0 0.0
  %368 = vmatprep.subr.mxu0 0.0
  %369 = vmatpush2.msra.mxu0 0.0
  %370 = vmatprep.subr.mxu0 0.0
  %371 = vmatpush2.msra.mxu0 0.0
  %372 = vmatprep.subr.mxu0 0.0
  %373 = vmatpush2.msra.mxu0 0.0
  %374 = vmatprep.subr.mxu0 0.0
  %375 = vmatpush2.msra.mxu0 0.0
  %376 = vmatprep.subr.mxu0 0.0
  %377 = vmatpush2.msra.mxu0 0.0
  %378 = vmatprep.subr.mxu0 0.0
  %379 = vmatpush2.msra.mxu0 0.0
  %380 = vmatprep.subr.mxu0 0.0
  %381 = vmatpush2.msra.mxu0 0.0
  %382 = vmatprep.subr.mxu0 0.0
  %383 = vmatpush2.msra.mxu0 0.0
  %384 = vmatprep.subr.mxu0 0.0
  %385 = vmatpush2.msra.mxu0 0.0
  %386 = vmatprep.subr.mxu0 0.0
  %387 = vmatpush2.msra.mxu0 0.0
  %388 = vmatprep.subr.mxu0 0.0
  %389 = vmatpush2.msra.mxu0 0.0
  %390 = vmatprep.subr.mxu0 0.0
  %391 = vmatpush2.msra.mxu0 0.0
  %392 = vmatprep.subr.mxu0 0.0
  %393 = vmatpush2.msra.mxu0 0.0
  %394 = vmatprep.mubr.f32.mxu0 0.0
  %395 = vmatmul.mubr.f32.gmra.mxu0 %v327
  %v396 = vpop.f32.mrf.mxu0
  %v397 = vadd.f32 0.0, %v396
  %v398 = vpop.f32.mrf.mxu0
  %399 = vdwg.mxu0
  %v400 = vadd.f32 %v329, %v397
  %v401 = vtanh.pop %v400
  %s402 = scalar_lea.vmem %s0, 10
  %v403 = vld [vmem:[%s402] sm:$0x3]
  %404 = vmatprep.subr.mxu0 0.0
  %405 = vmatpush1.msra.mxu0 %v32
  %406 = vmatprep.subr.mxu0 0.0
  %407 = vmatpush1.msra.mxu0 %v31
  %408 = vmatprep.subr.mxu0 0.0
  %409 = vmatpush1.msra.mxu0 %v30
  %410 = vmatprep.subr.mxu0 0.0
  %411 = vmatpush1.msra.mxu0 %v29
  %412 = vmatprep.subr.mxu0 0.0
  %413 = vmatpush1.msra.mxu0 %v28
  %414 = vmatprep.subr.mxu0 0.0
  %415 = vmatpush1.msra.mxu0 %v27
  %416 = vmatprep.subr.mxu0 0.0
  %417 = vmatpush1.msra.mxu0 %v26
  %418 = vmatprep.subr.mxu0 0.0
  %419 = vmatpush1.msra.mxu0 %v25
  %420 = vmatprep.subr.mxu0 0.0
  %421 = vmatpush1.msra.mxu0 %v24
  %422 = vmatprep.subr.mxu0 0.0
  %423 = vmatpush1.msra.mxu0 %v23
  %424 = vmatprep.subr.mxu0 0.0
  %425 = vmatpush1.msra.mxu0 %v22
  %426 = vmatprep.subr.mxu0 0.0
  %427 = vmatpush1.msra.mxu0 %v21
  %428 = vmatprep.subr.mxu0 0.0
  %429 = vmatpush1.msra.mxu0 %v20
  %430 = vmatprep.subr.mxu0 0.0
  %431 = vmatpush1.msra.mxu0 %v19
  %432 = vmatprep.subr.mxu0 0.0
  %433 = vmatpush1.msra.mxu0 %v18
  %434 = vmatprep.subr.mxu0 0.0
  %435 = vmatpush1.msra.mxu0 %v17
  %436 = vmatprep.subr.mxu0 0.0
  %437 = vmatpush2.msra.mxu0 0.0
  %438 = vmatprep.subr.mxu0 0.0
  %439 = vmatpush2.msra.mxu0 0.0
  %440 = vmatprep.subr.mxu0 0.0
  %441 = vmatpush2.msra.mxu0 0.0
  %442 = vmatprep.subr.mxu0 0.0
  %443 = vmatpush2.msra.mxu0 0.0
  %444 = vmatprep.subr.mxu0 0.0
  %445 = vmatpush2.msra.mxu0 0.0
  %446 = vmatprep.subr.mxu0 0.0
  %447 = vmatpush2.msra.mxu0 0.0
  %448 = vmatprep.subr.mxu0 0.0
  %449 = vmatpush2.msra.mxu0 0.0
  %450 = vmatprep.subr.mxu0 0.0
  %451 = vmatpush2.msra.mxu0 0.0
  %452 = vmatprep.subr.mxu0 0.0
  %453 = vmatpush2.msra.mxu0 0.0
  %454 = vmatprep.subr.mxu0 0.0
  %455 = vmatpush2.msra.mxu0 0.0
  %456 = vmatprep.subr.mxu0 0.0
  %457 = vmatpush2.msra.mxu0 0.0
  %458 = vmatprep.subr.mxu0 0.0
  %459 = vmatpush2.msra.mxu0 0.0
  %460 = vmatprep.subr.mxu0 0.0
  %461 = vmatpush2.msra.mxu0 0.0
  %462 = vmatprep.subr.mxu0 0.0
  %463 = vmatpush2.msra.mxu0 0.0
  %464 = vmatprep.subr.mxu0 0.0
  %465 = vmatpush2.msra.mxu0 0.0
  %466 = vmatprep.subr.mxu0 0.0
  %467 = vmatpush2.msra.mxu0 0.0
  %468 = vmatprep.mubr.f32.mxu0 0.0
  %469 = vmatmul.mubr.f32.gmra.mxu0 %v401
  %v470 = vpop.f32.mrf.mxu0
  %v471 = vadd.f32 0.0, %v470
  %v472 = vpop.f32.mrf.mxu0
  %473 = vdwg.mxu0
  %v474 = vadd.f32 %v403, %v471
  %v475 = vtanh.pop %v474
  %s476 = scalar_lea.vmem %s0, 12
  %v477 = vld [vmem:[%s476] sm:$0x3]
  %478 = vmatprep.subr.mxu0 0.0
  %479 = vmatpush1.msra.mxu0 %v32
  %480 = vmatprep.subr.mxu0 0.0
  %481 = vmatpush1.msra.mxu0 %v31
  %482 = vmatprep.subr.mxu0 0.0
  %483 = vmatpush1.msra.mxu0 %v30
  %484 = vmatprep.subr.mxu0 0.0
  %485 = vmatpush1.msra.mxu0 %v29
  %486 = vmatprep.subr.mxu0 0.0
  %487 = vmatpush1.msra.mxu0 %v28
  %488 = vmatprep.subr.mxu0 0.0
  %489 = vmatpush1.msra.mxu0 %v27
  %490 = vmatprep.subr.mxu0 0.0
  %491 = vmatpush1.msra.mxu0 %v26
  %492 = vmatprep.subr.mxu0 0.0
  %493 = vmatpush1.msra.mxu0 %v25
  %494 = vmatprep.subr.mxu0 0.0
  %495 = vmatpush1.msra.mxu0 %v24
  %496 = vmatprep.subr.mxu0 0.0
  %497 = vmatpush1.msra.mxu0 %v23
  %498 = vmatprep.subr.mxu0 0.0
  %499 = vmatpush1.msra.mxu0 %v22
  %500 = vmatprep.subr.mxu0 0.0
  %501 = vmatpush1.msra.mxu0 %v21
  %502 = vmatprep.subr.mxu0 0.0
  %503 = vmatpush1.msra.mxu0 %v20
  %504 = vmatprep.subr.mxu0 0.0
  %505 = vmatpush1.msra.mxu0 %v19
  %506 = vmatprep.subr.mxu0 0.0
  %507 = vmatpush1.msra.mxu0 %v18
  %508 = vmatprep.subr.mxu0 0.0
  %509 = vmatpush1.msra.mxu0 %v17
  %510 = vmatprep.subr.mxu0 0.0
  %511 = vmatpush2.msra.mxu0 0.0
  %512 = vmatprep.subr.mxu0 0.0
  %513 = vmatpush2.msra.mxu0 0.0
  %514 = vmatprep.subr.mxu0 0.0
  %515 = vmatpush2.msra.mxu0 0.0
  %516 = vmatprep.subr.mxu0 0.0
  %517 = vmatpush2.msra.mxu0 0.0
  %518 = vmatprep.subr.mxu0 0.0
  %519 = vmatpush2.msra.mxu0 0.0
  %520 = vmatprep.subr.mxu0 0.0
  %521 = vmatpush2.msra.mxu0 0.0
  %522 = vmatprep.subr.mxu0 0.0
  %523 = vmatpush2.msra.mxu0 0.0
  %524 = vmatprep.subr.mxu0 0.0
  %525 = vmatpush2.msra.mxu0 0.0
  %526 = vmatprep.subr.mxu0 0.0
  %527 = vmatpush2.msra.mxu0 0.0
  %528 = vmatprep.subr.mxu0 0.0
  %529 = vmatpush2.msra.mxu0 0.0
  %530 = vmatprep.subr.mxu0 0.0
  %531 = vmatpush2.msra.mxu0 0.0
  %532 = vmatprep.subr.mxu0 0.0
  %533 = vmatpush2.msra.mxu0 0.0
  %534 = vmatprep.subr.mxu0 0.0
  %535 = vmatpush2.msra.mxu0 0.0
  %536 = vmatprep.subr.mxu0 0.0
  %537 = vmatpush2.msra.mxu0 0.0
  %538 = vmatprep.subr.mxu0 0.0
  %539 = vmatpush2.msra.mxu0 0.0
  %540 = vmatprep.subr.mxu0 0.0
  %541 = vmatpush2.msra.mxu0 0.0
  %542 = vmatprep.mubr.f32.mxu0 0.0
  %543 = vmatmul.mubr.f32.gmra.mxu0 %v475
  %v544 = vpop.f32.mrf.mxu0
  %v545 = vadd.f32 0.0, %v544
  %v546 = vpop.f32.mrf.mxu0
  %547 = vdwg.mxu0
  %v548 = vadd.f32 %v477, %v545
  %v549 = vtanh.pop %v548
  %s550 = scalar_lea.vmem %s0, 14
  %v551 = vld [vmem:[%s550] sm:$0x3]
  %552 = vmatprep.subr.mxu0 0.0
  %553 = vmatpush1.msra.mxu0 %v32
  %554 = vmatprep.subr.mxu0 0.0
  %555 = vmatpush1.msra.mxu0 %v31
  %556 = vmatprep.subr.mxu0 0.0
  %557 = vmatpush1.msra.mxu0 %v30
  %558 = vmatprep.subr.mxu0 0.0
  %559 = vmatpush1.msra.mxu0 %v29
  %560 = vmatprep.subr.mxu0 0.0
  %561 = vmatpush1.msra.mxu0 %v28
  %562 = vmatprep.subr.mxu0 0.0
  %563 = vmatpush1.msra.mxu0 %v27
  %564 = vmatprep.subr.mxu0 0.0
  %565 = vmatpush1.msra.mxu0 %v26
  %566 = vmatprep.subr.mxu0 0.0
  %567 = vmatpush1.msra.mxu0 %v25
  %568 = vmatprep.subr.mxu0 0.0
  %569 = vmatpush1.msra.mxu0 %v24
  %570 = vmatprep.subr.mxu0 0.0
  %571 = vmatpush1.msra.mxu0 %v23
  %572 = vmatprep.subr.mxu0 0.0
  %573 = vmatpush1.msra.mxu0 %v22
  %574 = vmatprep.subr.mxu0 0.0
  %575 = vmatpush1.msra.mxu0 %v21
  %576 = vmatprep.subr.mxu0 0.0
  %577 = vmatpush1.msra.mxu0 %v20
  %578 = vmatprep.subr.mxu0 0.0
  %579 = vmatpush1.msra.mxu0 %v19
  %580 = vmatprep.subr.mxu0 0.0
  %581 = vmatpush1.msra.mxu0 %v18
  %582 = vmatprep.subr.mxu0 0.0
  %583 = vmatpush1.msra.mxu0 %v17
  %584 = vmatprep.subr.mxu0 0.0
  %585 = vmatpush2.msra.mxu0 0.0
  %586 = vmatprep.subr.mxu0 0.0
  %587 = vmatpush2.msra.mxu0 0.0
  %588 = vmatprep.subr.mxu0 0.0
  %589 = vmatpush2.msra.mxu0 0.0
  %590 = vmatprep.subr.mxu0 0.0
  %591 = vmatpush2.msra.mxu0 0.0
  %592 = vmatprep.subr.mxu0 0.0
  %593 = vmatpush2.msra.mxu0 0.0
  %594 = vmatprep.subr.mxu0 0.0
  %595 = vmatpush2.msra.mxu0 0.0
  %596 = vmatprep.subr.mxu0 0.0
  %597 = vmatpush2.msra.mxu0 0.0
  %598 = vmatprep.subr.mxu0 0.0
  %599 = vmatpush2.msra.mxu0 0.0
  %600 = vmatprep.subr.mxu0 0.0
  %601 = vmatpush2.msra.mxu0 0.0
  %602 = vmatprep.subr.mxu0 0.0
  %603 = vmatpush2.msra.mxu0 0.0
  %604 = vmatprep.subr.mxu0 0.0
  %605 = vmatpush2.msra.mxu0 0.0
  %606 = vmatprep.subr.mxu0 0.0
  %607 = vmatpush2.msra.mxu0 0.0
  %608 = vmatprep.subr.mxu0 0.0
  %609 = vmatpush2.msra.mxu0 0.0
  %610 = vmatprep.subr.mxu0 0.0
  %611 = vmatpush2.msra.mxu0 0.0
  %612 = vmatprep.subr.mxu0 0.0
  %613 = vmatpush2.msra.mxu0 0.0
  %614 = vmatprep.subr.mxu0 0.0
  %615 = vmatpush2.msra.mxu0 0.0
  %616 = vmatprep.mubr.f32.mxu0 0.0
  %617 = vmatmul.mubr.f32.gmra.mxu0 %v549
  %v618 = vpop.f32.mrf.mxu0
  %v619 = vadd.f32 0.0, %v618
  %v620 = vpop.f32.mrf.mxu0
  %621 = vdwg.mxu0
  %v622 = vadd.f32 %v551, %v619
  %v623 = vtanh.pop %v622
  %v624 = vld [vmem:[%s2] sm:$0xff]
  %v625 = vld [vmem:[%s2 + $0x8] sm:$0xff]
  %v626 = vld [vmem:[%s2 + $0x10] sm:$0xff]
  %v627 = vld [vmem:[%s2 + $0x18] sm:$0xff]
  %v628 = vld [vmem:[%s2 + $0x20] sm:$0xff]
  %v629 = vld [vmem:[%s2 + $0x28] sm:$0xff]
  %v630 = vld [vmem:[%s2 + $0x30] sm:$0xff]
  %v631 = vld [vmem:[%s2 + $0x38] sm:$0xff]
  %v632 = vld [vmem:[%s2 + $0x40] sm:$0xff]
  %v633 = vld [vmem:[%s2 + $0x48] sm:$0xff]
  %v634 = vld [vmem:[%s2 + $0x50] sm:$0xff]
  %v635 = vld [vmem:[%s2 + $0x58] sm:$0xff]
  %v636 = vld [vmem:[%s2 + $0x60] sm:$0xff]
  %v637 = vld [vmem:[%s2 + $0x68] sm:$0xff]
  %v638 = vld [vmem:[%s2 + $0x70] sm:$0xff]
  %v639 = vld [vmem:[%s2 + $0x78] sm:$0xff]
  %v640 = vld [vmem:[%s3] sm:$0x1]
  %v642 = vlaneseq
  %v643 = vshrl.u32 %v642, 7
  %v644 = vsub.s32 0, %v643
  %v645 = vrot.slane %v640, %v644
  %647 = vmatprep.subr.mxu0 0.0
  %648 = vmatpush1.msra.mxu0 %v639
  %649 = vmatprep.subr.mxu0 0.0
  %650 = vmatpush1.msra.mxu0 %v638
  %651 = vmatprep.subr.mxu0 0.0
  %652 = vmatpush1.msra.mxu0 %v637
  %653 = vmatprep.subr.mxu0 0.0
  %654 = vmatpush1.msra.mxu0 %v636
  %655 = vmatprep.subr.mxu0 0.0
  %656 = vmatpush1.msra.mxu0 %v635
  %657 = vmatprep.subr.mxu0 0.0
  %658 = vmatpush1.msra.mxu0 %v634
  %659 = vmatprep.subr.mxu0 0.0
  %660 = vmatpush1.msra.mxu0 %v633
  %661 = vmatprep.subr.mxu0 0.0
  %662 = vmatpush1.msra.mxu0 %v632
  %663 = vmatprep.subr.mxu0 0.0
  %664 = vmatpush1.msra.mxu0 %v631
  %665 = vmatprep.subr.mxu0 0.0
  %666 = vmatpush1.msra.mxu0 %v630
  %667 = vmatprep.subr.mxu0 0.0
  %668 = vmatpush1.msra.mxu0 %v629
  %669 = vmatprep.subr.mxu0 0.0
  %670 = vmatpush1.msra.mxu0 %v628
  %671 = vmatprep.subr.mxu0 0.0
  %672 = vmatpush1.msra.mxu0 %v627
  %673 = vmatprep.subr.mxu0 0.0
  %674 = vmatpush1.msra.mxu0 %v626
  %675 = vmatprep.subr.mxu0 0.0
  %676 = vmatpush1.msra.mxu0 %v625
  %677 = vmatprep.subr.mxu0 0.0
  %678 = vmatpush1.msra.mxu0 %v624
  %679 = vmatprep.subr.mxu0 0.0
  %680 = vmatpush2.msra.mxu0 0.0
  %681 = vmatprep.subr.mxu0 0.0
  %682 = vmatpush2.msra.mxu0 0.0
  %683 = vmatprep.subr.mxu0 0.0
  %684 = vmatpush2.msra.mxu0 0.0
  %685 = vmatprep.subr.mxu0 0.0
  %686 = vmatpush2.msra.mxu0 0.0
  %687 = vmatprep.subr.mxu0 0.0
  %688 = vmatpush2.msra.mxu0 0.0
  %689 = vmatprep.subr.mxu0 0.0
  %690 = vmatpush2.msra.mxu0 0.0
  %691 = vmatprep.subr.mxu0 0.0
  %692 = vmatpush2.msra.mxu0 0.0
  %693 = vmatprep.subr.mxu0 0.0
  %694 = vmatpush2.msra.mxu0 0.0
  %695 = vmatprep.subr.mxu0 0.0
  %696 = vmatpush2.msra.mxu0 0.0
  %697 = vmatprep.subr.mxu0 0.0
  %698 = vmatpush2.msra.mxu0 0.0
  %699 = vmatprep.subr.mxu0 0.0
  %700 = vmatpush2.msra.mxu0 0.0
  %701 = vmatprep.subr.mxu0 0.0
  %702 = vmatpush2.msra.mxu0 0.0
  %703 = vmatprep.subr.mxu0 0.0
  %704 = vmatpush2.msra.mxu0 0.0
  %705 = vmatprep.subr.mxu0 0.0
  %706 = vmatpush2.msra.mxu0 0.0
  %707 = vmatprep.subr.mxu0 0.0
  %708 = vmatpush2.msra.mxu0 0.0
  %709 = vmatprep.subr.mxu0 0.0
  %710 = vmatpush2.msra.mxu0 0.0
  %711 = vmatprep.mubr.f32.mxu0 0.0
  %712 = vmatmul.mubr.f32.gmra.mxu0 %v623
  %v713 = vpop.f32.mrf.mxu0
  %v714 = vadd.f32 %v645, %v713
  %v715 = vpop.f32.mrf.mxu0
  %716 = vdwg.mxu0
  %717 = vst [vmem:[%s4] sm:$0x3] %v714
  // Predicated region
  $region18: #{rnn_model_forward.1} parent=0 // pred_check
    _
  $region19: #{rnn_model_forward.1} parent=0 // pred_check_branch
    %719 = sbr.rel (0) target = $region21
  $region20: #{rnn_model_forward.1} parent=0 // pred_region
    _
  $region21: #{rnn_model_forward.1} parent=0 // pred_fallthru
    _
  // Predicated region
  $region22: #{rnn_model_forward.1} parent=0 // pred_check
    _
  $region23: #{rnn_model_forward.1} parent=0 // pred_check_branch
    %721 = sbr.rel (0) target = $region25
  $region24: #{rnn_model_forward.1} parent=0 // pred_region
    _
  $region25: #{rnn_model_forward.1} parent=0 // pred_fallthru
    _

</llo_original>
